<compile_context>
chip_gen: v5e
topology: v5e:2x2
jax: 0.10.0
libtpu: 0.0.40
codegen_flags: <defaults>
</compile_context>

<pallas_src>
import functools

import jax
import jax.numpy as jnp
from jax.experimental import pallas as pl
from jax.experimental.pallas import tpu as pltpu

_CLENSHAW_MIN_DEGREE = 7  # direct recurrence below this, Clenshaw at/above


def _lcp_kernel(coeffs_ref, x_ref, o_ref, *, degree: int):
    """Elementwise Chebyshev expansion on one [tb, tc] tile.

    coeffs_ref : SMEM ref, shape (degree+1,), float32, already sigmoid()'d.
    x_ref      : VMEM ref, shape (tb, tc)
    o_ref      : VMEM ref, shape (tb, tc)
    """
    x = x_ref[...].astype(jnp.float32)

    def c(i):
        return coeffs_ref[i]  # scalar read from SMEM (pre-activated)

    if degree == 0:
        result = jnp.zeros_like(x) + c(0)
    elif degree == 1:
        result = c(0) + c(1) * x
    elif degree < _CLENSHAW_MIN_DEGREE:
        # Direct recurrence (matches reference op order); x2 hoisted so the
        # inner loop is mul+sub (recurrence) + mul+add (accumulate) per term.
        x2 = x + x
        result = c(0) + c(1) * x
        t_prev = x
        t_curr = x2 * x - 1.0  # T_2
        result = result + c(2) * t_curr
        for n in range(3, degree + 1):
            t_next = x2 * t_curr - t_prev
            t_prev, t_curr = t_curr, t_next
            result = result + c(n) * t_curr
    else:
        # Clenshaw recurrence: b_k = c_k + 2x*b_{k+1} - b_{k+2};
        # S = c_0 + x*b_1 - b_2.  One fewer VPU op per term than the direct
        # recurrence+accumulate, which matters once degree grows enough for
        # the VALU slot (not HBM) to bind (earliest on v7x).
        x2 = x + x
        b2 = jnp.zeros_like(x)
        b1 = jnp.zeros_like(x) + c(degree)
        for n in range(degree - 1, 0, -1):
            b0 = c(n) + x2 * b1 - b2
            b2, b1 = b1, b0
        result = c(0) + x * b1 - b2

    o_ref[...] = result.astype(o_ref.dtype)


def lcp_forward(
    x: jax.Array,
    coefficients: jax.Array,
    degree: int,
    *,
    block_b: int | None = None,
    block_c: int | None = None,
    target_tile_bytes: int = 4 << 20,
) -> jax.Array:
    """Applies the LCP transform. x: [B, C], coefficients: [degree+1]."""
    B, C = x.shape

    # Hoist the sigmoid out of the kernel (done once, not per grid step).
    coeffs = jax.nn.sigmoid(coefficients.astype(jnp.float32))

    itemsize = jnp.dtype(x.dtype).itemsize
    sub = max(8, 32 // itemsize)  # native sublane packing: 8 f32 / 16 bf16 / 32 i8

    # ---- lane (last) dim: prefer full rows => one contiguous HBM burst/tile.
    if block_c is None:
        if C * itemsize <= target_tile_bytes or C <= 128:
            tc = C
        else:
            tc = max(128, (target_tile_bytes // (sub * itemsize)) // 128 * 128)
            tc = min(tc, (C // 128) * 128)
    else:
        tc = min(block_c, C)
    if tc < C and tc % 128 != 0:
        tc = C if C < 128 else max(128, tc - tc % 128)

    # ---- sublane dim: fill the tile budget, rounded to the dtype packing.
    if block_b is None:
        rows = max(1, target_tile_bytes // max(1, tc * itemsize))
        tb = B if rows >= B else max(sub, rows - rows % sub)
        # Keep >=2 grid steps along B when possible so the "parallel" axes can
        # shard across both TensorCores on v7x.
        if tb >= B and tc >= C and B >= 2 * sub:
            half = -(-B // 2)
            tb = -(-half // sub) * sub
    else:
        tb = min(block_b, B)
    if tb < B and tb % sub != 0:
        tb = B if B < sub else max(sub, tb - tb % sub)

    # No padding / slicing: cdiv grid, Pallas handles ragged edge blocks
    # (elementwise op -> overhang values are never written to the output).
    grid = (pl.cdiv(B, tb), pl.cdiv(C, tc))
    kernel = functools.partial(_lcp_kernel, degree=degree)

    # TODO(synk): optionally sweep pipeline_mode=pl.Buffered(3) on x/out once
    # tile sizes are fixed; low single-digit % win at one extra tile of VMEM.
    return pl.pallas_call(
        kernel,
        out_shape=jax.ShapeDtypeStruct((B, C), x.dtype),
        grid=grid,
        in_specs=[
            pl.BlockSpec(memory_space=pltpu.MemorySpace.SMEM),  # coeffs scalars
            pl.BlockSpec((tb, tc), lambda i, j: (i, j)),        # x tile in VMEM
        ],
        out_specs=pl.BlockSpec((tb, tc), lambda i, j: (i, j)),
        compiler_params=pltpu.CompilerParams(
            dimension_semantics=("parallel", "parallel"),
            # Covers 4 MiB double-buffered in+out tiles plus in-kernel f32
            # temps; below physical VMEM on v5e/v6e (128 MiB) and v7x (64 MiB),
            # and above v5e's 16 MiB scoped default.
            vmem_limit_bytes=48 << 20,
        ),
    )(coeffs, x)


def lcp_reference(x: jax.Array, coefficients: jax.Array, degree: int) -> jax.Array:
    """Pure-JAX reference mirroring the PyTorch forward."""
    coeffs = jax.nn.sigmoid(coefficients.astype(jnp.float32))
    xf = x.astype(jnp.float32)
    result = coeffs[0] * jnp.ones_like(xf)
    t_prev, t_curr = jnp.ones_like(xf), xf
    if degree >= 1:
        result = result + coeffs[1] * t_curr
    for n in range(2, degree + 1):
        t_next = 2.0 * xf * t_curr - t_prev
        t_prev, t_curr = t_curr, t_next
        result = result + coeffs[n] * t_curr
    return result.astype(x.dtype)


if __name__ == "__main__":
    degree = 4

    # nn.Parameter(torch.ones(degree + 1)) init.
    coefficients = jnp.ones((degree + 1,), dtype=jnp.float32)

    # Primary small test matching the module's [B, C] input.
    B, C = 2, 32
    x = jax.random.normal(jax.random.PRNGKey(0), (B, C), dtype=jnp.float32)
    out = jax.block_until_ready(lcp_forward(x, coefficients, degree))
    ref = lcp_reference(x, coefficients, degree)
    assert out.shape == (B, C)
    assert jnp.allclose(out, ref, atol=1e-5, rtol=1e-5)

    # Multi-tile grid with ragged edge blocks in both dims (no pad / no slice).
    B2, C2 = 20, 300
    x2 = jax.random.normal(jax.random.PRNGKey(1), (B2, C2), dtype=jnp.float32)
    out2 = jax.block_until_ready(
        lcp_forward(x2, coefficients, degree, block_b=8, block_c=128)
    )
    ref2 = lcp_reference(x2, coefficients, degree)
    assert out2.shape == (B2, C2)
    assert jnp.allclose(out2, ref2, atol=1e-5, rtol=1e-5)

    # High-degree path exercising the Clenshaw recurrence.
    deg3 = 10
    coef3 = jax.random.normal(jax.random.PRNGKey(2), (deg3 + 1,), dtype=jnp.float32)
    x3 = jax.random.uniform(
        jax.random.PRNGKey(3), (16, 256), dtype=jnp.float32, minval=-1.0, maxval=1.0
    )
    out3 = jax.block_until_ready(lcp_forward(x3, coef3, deg3))
    ref3 = lcp_reference(x3, coef3, deg3)
    assert jnp.allclose(out3, ref3, atol=1e-4, rtol=1e-4)

    print("KERNEL_OK")
</pallas_src>

<mosaic_0001>
module attributes {stable_mosaic.version = 11 : i64} {
  func.func @_lcp_kernel(%arg0: i32, %arg1: i32, %arg2: memref<5xf32, #tpu.memory_space<smem>>, %arg3: memref<2x32xf32, #tpu.memory_space<vmem>>, %arg4: memref<2x32xf32, #tpu.memory_space<vmem>>) attributes {dimension_semantics = [#tpu.dimension_semantics<parallel>, #tpu.dimension_semantics<parallel>], iteration_bounds = array<i64: 1, 1>, scalar_prefetch = 0 : i64, scratch_operands = 0 : i64, tpu.core_type = #tpu.core_type<tc>, window_params = [{transform_indices = @transform_0, window_bounds = array<i64: 5>}, {transform_indices = @transform_1, window_bounds = array<i64: 2, 32>}, {transform_indices = @transform_2, window_bounds = array<i64: 2, 32>}]} {
    %c0 = arith.constant 0 : index
    %c0_0 = arith.constant 0 : index
    %0 = vector.load %arg3[%c0, %c0_0] : memref<2x32xf32, #tpu.memory_space<vmem>>, vector<2x32xf32>
    %1 = arith.addf %0, %0 : vector<2x32xf32>
    %c0_1 = arith.constant 0 : index
    %2 = memref.load %arg2[%c0_1] : memref<5xf32, #tpu.memory_space<smem>>
    %c1 = arith.constant 1 : index
    %3 = memref.load %arg2[%c1] : memref<5xf32, #tpu.memory_space<smem>>
    %4 = vector.broadcast %3 : f32 to vector<2x32xf32>
    %5 = arith.mulf %4, %0 : vector<2x32xf32>
    %6 = vector.broadcast %2 : f32 to vector<2x32xf32>
    %7 = arith.addf %6, %5 : vector<2x32xf32>
    %8 = arith.mulf %1, %0 : vector<2x32xf32>
    %cst = arith.constant 1.000000e+00 : f32
    %9 = vector.broadcast %cst : f32 to vector<2x32xf32>
    %10 = arith.subf %8, %9 : vector<2x32xf32>
    %c2 = arith.constant 2 : index
    %11 = memref.load %arg2[%c2] : memref<5xf32, #tpu.memory_space<smem>>
    %12 = vector.broadcast %11 : f32 to vector<2x32xf32>
    %13 = arith.mulf %12, %10 : vector<2x32xf32>
    %14 = arith.addf %7, %13 : vector<2x32xf32>
    %15 = arith.mulf %1, %10 : vector<2x32xf32>
    %16 = arith.subf %15, %0 : vector<2x32xf32>
    %c3 = arith.constant 3 : index
    %17 = memref.load %arg2[%c3] : memref<5xf32, #tpu.memory_space<smem>>
    %18 = vector.broadcast %17 : f32 to vector<2x32xf32>
    %19 = arith.mulf %18, %16 : vector<2x32xf32>
    %20 = arith.addf %14, %19 : vector<2x32xf32>
    %21 = arith.mulf %1, %16 : vector<2x32xf32>
    %22 = arith.subf %21, %10 : vector<2x32xf32>
    %c4 = arith.constant 4 : index
    %23 = memref.load %arg2[%c4] : memref<5xf32, #tpu.memory_space<smem>>
    %24 = vector.broadcast %23 : f32 to vector<2x32xf32>
    %25 = arith.mulf %24, %22 : vector<2x32xf32>
    %26 = arith.addf %20, %25 : vector<2x32xf32>
    %c0_2 = arith.constant 0 : index
    %c0_3 = arith.constant 0 : index
    %27 = vector.load %arg4[%c0_2, %c0_3] : memref<2x32xf32, #tpu.memory_space<vmem>>, vector<2x32xf32>
    tpu.vector_store %arg4[%c0_2, %c0_3], %26 {strides = array<i32>} : memref<2x32xf32, #tpu.memory_space<vmem>>, vector<2x32xf32>,
    return
  }
  func.func @transform_0(%arg0: i32, %arg1: i32) -> i32 {
    %c0_i32 = arith.constant 0 : i32
    %c0_i32_0 = arith.constant 0 : i32
    return %c0_i32 : i32
  }
  func.func @transform_1(%arg0: i32, %arg1: i32) -> (i32, i32) {
    %c0_i32 = arith.constant 0 : i32
    return %arg0, %arg1 : i32, i32
  }
  func.func @transform_2(%arg0: i32, %arg1: i32) -> (i32, i32) {
    %c0_i32 = arith.constant 0 : i32
    return %arg0, %arg1 : i32, i32
  }
}

</mosaic_0001>

<llo_original>
// kernel: tpu_custom_call.1
$region0: #{tpu_custom_call.1}
  #allocation0 [shape = 'u32[]', space=smem, size = 0x4, offset = 0x4, fixed_abs, tag = 'smem constant byte address 0x4 - core index']
  #allocation1 [shape = 'u32[72,128]{1,0:T(1,128)}', space=vmem, size = 0x9000, scoped, tag = 'internal scratch']
  %s0 = inlined_call_operand.hbm [shape: f32[5], index: 0, kind: input, shape index: {}]
  %s1 = inlined_call_operand.hbm [shape: f32[2,32], index: 1, kind: input, shape index: {}]
  %s2 = inlined_call_operand.hbm [shape: f32[2,32], index: 2, kind: output, shape index: {}]
  %s3 = sld [smem:[#allocation0]]
  $region26: #{tpu_custom_call.1} parent=0
    _
  %s5 = ssub.s32 1, %s3
  %s6 = scalar_select 0, %s5, %s3
  $region1: #{tpu_custom_call.1} parent=0
    #allocation2 [shape = 'u8[512]{0}', space=smem, size = 0x200, scoped, tag = 'input window, operand 0, single buffered']
    #allocation3 [shape = 's32[1]{0}', space=sflag, size = 0x4, scoped, tag = 'scoped memory for tpu_custom_call.1']
    #allocation4 [shape = 's32[1]{0}', space=sflag, size = 0x4, scoped, tag = 'scoped memory for tpu_custom_call.1']
    #allocation5 [shape = 's32[1]{0}', space=sflag, size = 0x4, scoped, tag = 'scoped memory for tpu_custom_call.1']
    #allocation6 [shape = 'u8[1024]{0}', space=vmem, size = 0x400, scoped, tag = 'input window, operand 1, single buffered']
    #allocation7 [shape = 'u8[1024]{0}', space=vmem, size = 0x400, scoped, tag = 'output window, operand 0, single buffered']
    %7 = vsyncpa [#allocation5], 0
    %8 = vsyncpa [#allocation3], 0
    %9 = vsyncpa [#allocation4], 0
    // Predicated region
    $region2: #{tpu_custom_call.1} parent=1 // pred_check
      _
    $region3: #{tpu_custom_call.1} parent=1 // pred_check_branch
      %11 = sbr.rel (0) target = $region5
    $region4: #{tpu_custom_call.1} parent=1 // pred_region
      %13 = vsyncadd [#allocation5], 0
      %s15 = sshll.u32 %s0, 4
      %s16 = int_to_ptr.hbm [resolvable:$true] %s15
      %18 = dma.hbm_to_smem %s16, 16, [#allocation2], [#allocation5]
    $region5: #{tpu_custom_call.1} parent=1 // pred_fallthru
      _
    // Predicated region
    $region6: #{tpu_custom_call.1} parent=1 // pred_check
      _
    $region7: #{tpu_custom_call.1} parent=1 // pred_check_branch
      %20 = sbr.rel (0) target = $region9
    $region8: #{tpu_custom_call.1} parent=1 // pred_region
      %22 = vsyncadd [#allocation3], 0
      %s24 = sshll.u32 %s1, 4
      %s25 = int_to_ptr.hbm [resolvable:$true] %s24
      %s26 = sshll.u32 [#allocation6], 4
      %s27 = int_to_ptr.vmem [resolvable:$true] %s26
      %29 = dma.hbm_to_vmem [thread:$0]  %s25, 32, %s27, [#allocation3]
    $region9: #{tpu_custom_call.1} parent=1 // pred_fallthru
      _
    // Predicated region
    $region10: #{tpu_custom_call.1} parent=1 // pred_check
      _
    $region11: #{tpu_custom_call.1} parent=1 // pred_check_branch
      %31 = sbr.rel (0) target = $region13
    $region12: #{tpu_custom_call.1} parent=1 // pred_region
      %33 = dma.done [#allocation5], 16
    $region13: #{tpu_custom_call.1} parent=1 // pred_fallthru
      _
    // Predicated region
    $region14: #{tpu_custom_call.1} parent=1 // pred_check
      _
    $region15: #{tpu_custom_call.1} parent=1 // pred_check_branch
      %35 = sbr.rel (0) target = $region17
    $region16: #{tpu_custom_call.1} parent=1 // pred_region
      %37 = dma.done [#allocation3], 32
    $region17: #{tpu_custom_call.1} parent=1 // pred_fallthru
      _
    %38 = sfence
    %v39 = vld [vmem:[#allocation6] sm:$0x3]
    %v40 = vadd.f32 %v39, %v39
    %s41 = sld [smem:[#allocation2]]
    %s42 = sld [smem:[#allocation2 + $0x1]]
    %v43 = vstv %s42
    %v44 = vmul.f32 %v43, %v39
    %v45 = vstv %s41
    %v46 = vadd.f32 %v45, %v44
    %v47 = vmul.f32 %v40, %v39
    %v48 = vsub.f32 %v47, 1.0
    %s49 = sld [smem:[#allocation2 + $0x2]]
    %v50 = vstv %s49
    %v51 = vmul.f32 %v50, %v48
    %v52 = vadd.f32 %v46, %v51
    %v53 = vmul.f32 %v40, %v48
    %v54 = vsub.f32 %v53, %v39
    %s55 = sld [smem:[#allocation2 + $0x3]]
    %v56 = vstv %s55
    %v57 = vmul.f32 %v56, %v54
    %v58 = vadd.f32 %v52, %v57
    %v59 = vmul.f32 %v40, %v54
    %v60 = vsub.f32 %v59, %v48
    %s61 = sld [smem:[#allocation2 + $0x4]]
    %v62 = vstv %s61
    %v63 = vmul.f32 %v62, %v60
    %v64 = vadd.f32 %v58, %v63
    %vm65 = vcmask 254976
    %66 = vst.msk [vmem:[#allocation7] sm:$0x3] %vm65, %v64
    // Predicated region
    $region18: #{tpu_custom_call.1} parent=1 // pred_check
      _
    $region19: #{tpu_custom_call.1} parent=1 // pred_check_branch
      %68 = sbr.rel (0) target = $region21
    $region20: #{tpu_custom_call.1} parent=1 // pred_region
      %70 = vsyncadd [#allocation4], 0
      %s72 = sshll.u32 [#allocation7], 4
      %s73 = int_to_ptr.vmem [resolvable:$true] %s72
      %s74 = sshll.u32 %s2, 4
      %s75 = int_to_ptr.hbm [resolvable:$true] %s74
      %77 = dma.vmem_to_hbm [thread:$0]  %s73, 32, %s75, [#allocation4]
    $region21: #{tpu_custom_call.1} parent=1 // pred_fallthru
      _
    // Predicated region
    $region22: #{tpu_custom_call.1} parent=1 // pred_check
      _
    $region23: #{tpu_custom_call.1} parent=1 // pred_check_branch
      %79 = sbr.rel (0) target = $region25
    $region24: #{tpu_custom_call.1} parent=1 // pred_region
      %81 = dma.done [#allocation4], 32
    $region25: #{tpu_custom_call.1} parent=1 // pred_fallthru
      _
    %82 = vsyncpa [#allocation3], 1
    %83 = vsyncpa [#allocation4], 1
    %84 = vsyncpa [#allocation5], 1

</llo_original>
